<compile_context>
chip_gen: v5e
topology: v5e:2x2
jax: 0.10.0
libtpu: 0.0.40
codegen_flags: <defaults>
</compile_context>

<pallas_src>
import functools

import jax
import jax.numpy as jnp
from jax import lax
from jax.experimental import pallas as pl
from jax.experimental.pallas import tpu as pltpu


_LANES = 128
_BLOCK_ROWS = 8  # sublanes per grid step -> one (8, 128) f32 vreg per component


def _unproject_loss_kernel(coords_ref, gt2d_ref, M_ref, intr_ref, out_ref,
                           *, n_valid, block_rows):
    # coords_ref: (3, block_rows, 128) VMEM   -- x/y/z planes, lane-dense
    # gt2d_ref:   (2, block_rows, 128) VMEM   -- u/v planes, lane-dense
    # M_ref:      (4, 4) SMEM (extrinsic), intr_ref: (3, 3) SMEM (intrinsic)
    # out_ref:    (1, 1, 128) VMEM partial-sum row for this grid step
    cx = coords_ref[0]
    cy = coords_ref[1]
    cz = coords_ref[2]

    # pred_3d = batch_coords @ M[:3, :3].T + M[:3, 3]   (scalar-broadcast VPU)
    px = cx * M_ref[0, 0] + cy * M_ref[0, 1] + cz * M_ref[0, 2] + M_ref[0, 3]
    py = cx * M_ref[1, 0] + cy * M_ref[1, 1] + cz * M_ref[1, 2] + M_ref[1, 3]
    pz = cx * M_ref[2, 0] + cy * M_ref[2, 1] + cz * M_ref[2, 2] + M_ref[2, 3]

    # Scalar reciprocals (scalar unit, effectively free) instead of vector divides.
    inv_fx = 1.0 / intr_ref[0, 0]
    inv_fy = 1.0 / intr_ref[1, 1]
    ox = intr_ref[0, 2]
    oy = intr_ref[1, 2]

    # gt_2d_vic = [(u - cx)/fx, (v - cy)/fy, 1]
    vic_x = (gt2d_ref[0] - ox) * inv_fx
    vic_y = (gt2d_ref[1] - oy) * inv_fy

    # chainplan = [vic_x * pz - px, vic_y * pz - py]
    chain0 = vic_x * pz - px
    chain1 = vic_y * pz - py

    # Fused: D_inplan / (|gt_2d_vic| * |pred_3d|)
    #      = sqrt(num) * rsqrt((vic_x^2 + vic_y^2 + 1) * (px^2 + py^2 + pz^2))
    num = chain0 * chain0 + chain1 * chain1
    den = (vic_x * vic_x + vic_y * vic_y + 1.0) * (px * px + py * py + pz * pz)
    l_every = jnp.sqrt(num) * lax.rsqrt(den)

    # Mask out the lane/row padding (flat index >= N) before reducing.
    lanes = out_ref.shape[-1]
    base = pl.program_id(0) * (block_rows * lanes)
    row = lax.broadcasted_iota(jnp.int32, (block_rows, lanes), 0)
    col = lax.broadcasted_iota(jnp.int32, (block_rows, lanes), 1)
    flat_idx = base + row * lanes + col
    l_every = jnp.where(flat_idx < n_valid, l_every, 0.0)

    # Per-block partial sum over the sublane axis -> lane-dense (1, 1, 128) row.
    out_ref[...] = jnp.sum(l_every, axis=0).reshape(1, 1, lanes)


def _unproject_loss_impl(batch_coords, gt_2d, M, intrinsic):
    batch_coords = batch_coords.astype(jnp.float32)
    gt_2d = gt_2d.astype(jnp.float32)
    M = M.astype(jnp.float32)
    intrinsic = intrinsic.astype(jnp.float32)

    B, J, _ = batch_coords.shape
    n = B * J
    block_elems = _BLOCK_ROWS * _LANES
    num_blocks = max(1, pl.cdiv(n, block_elems))
    n_pad = num_blocks * block_elems

    # Component-major, flattened, lane-dense layout: (C, rows, 128).
    coords_flat = jnp.transpose(batch_coords, (2, 0, 1)).reshape(3, n)
    gt2d_flat = jnp.transpose(gt_2d, (2, 0, 1)).reshape(2, n)
    pad = n_pad - n
    coords_flat = jnp.pad(coords_flat, ((0, 0), (0, pad)))
    gt2d_flat = jnp.pad(gt2d_flat, ((0, 0), (0, pad)))
    coords3 = coords_flat.reshape(3, num_blocks * _BLOCK_ROWS, _LANES)
    gt2d3 = gt2d_flat.reshape(2, num_blocks * _BLOCK_ROWS, _LANES)

    kernel = functools.partial(
        _unproject_loss_kernel, n_valid=n, block_rows=_BLOCK_ROWS)

    partials = pl.pallas_call(
        kernel,
        out_shape=jax.ShapeDtypeStruct((num_blocks, 1, _LANES), jnp.float32),
        grid=(num_blocks,),
        in_specs=[
            pl.BlockSpec((3, _BLOCK_ROWS, _LANES), lambda i: (0, i, 0)),
            pl.BlockSpec((2, _BLOCK_ROWS, _LANES), lambda i: (0, i, 0)),
            pl.BlockSpec(memory_space=pltpu.MemorySpace.SMEM),
            pl.BlockSpec(memory_space=pltpu.MemorySpace.SMEM),
        ],
        out_specs=pl.BlockSpec((1, 1, _LANES), lambda i: (i, 0, 0)),
        compiler_params=pltpu.CompilerParams(
            dimension_semantics=("parallel",)),
    )(coords3, gt2d3, M, intrinsic)

    return jnp.sum(partials) / jnp.float32(n)


# jit the whole thing so the layout transposes/pads fuse with the custom call.
unproject_loss = jax.jit(_unproject_loss_impl)


def _reference(batch_coords, gt_2d, M, intrinsic):
    # Pure-JAX reference mirroring the torch code, for a correctness check.
    pred_3d = jnp.matmul(batch_coords, M[:3, :3].T) + M[:3, 3]
    vic_x = (gt_2d[:, :, 0] - intrinsic[0, 2]) / intrinsic[0, 0]
    vic_y = (gt_2d[:, :, 1] - intrinsic[1, 2]) / intrinsic[1, 1]
    gt_2d_vic = jnp.stack([vic_x, vic_y, jnp.ones_like(vic_x)], axis=-1)
    gt_2d_norm = jnp.linalg.norm(gt_2d_vic, axis=2)
    chain0 = vic_x * pred_3d[:, :, 2] - pred_3d[:, :, 0]
    chain1 = vic_y * pred_3d[:, :, 2] - pred_3d[:, :, 1]
    d_inplan = jnp.sqrt(chain0 ** 2 + chain1 ** 2)
    joints_len = jnp.linalg.norm(pred_3d, axis=2)
    l_every = d_inplan / (gt_2d_norm * joints_len)
    return jnp.mean(l_every)


if __name__ == "__main__":
    key = jax.random.PRNGKey(0)
    k1, k2 = jax.random.split(key)

    B, J = 2, 8  # batch_size=2, joints_num=8

    # 3D joint coordinates (keep points away from the origin / camera plane)
    batch_coords = jax.random.normal(k1, (B, J, 3), dtype=jnp.float32) * 0.2
    batch_coords = batch_coords + jnp.array([0.0, 0.0, 2.0], dtype=jnp.float32)

    # 2D ground-truth pixel coordinates
    gt_2d = 128.0 + 40.0 * jax.random.normal(k2, (B, J, 2), dtype=jnp.float32)

    # Deterministic extrinsic (rotation about z + translation)
    c, s = jnp.cos(0.1), jnp.sin(0.1)
    M = jnp.array(
        [[c, -s, 0.0, 0.05],
         [s,  c, 0.0, -0.02],
         [0.0, 0.0, 1.0, 1.5],
         [0.0, 0.0, 0.0, 1.0]],
        dtype=jnp.float32,
    )

    # Deterministic pinhole intrinsic
    intrinsic = jnp.array(
        [[500.0, 0.0, 128.0],
         [0.0, 500.0, 128.0],
         [0.0, 0.0, 1.0]],
        dtype=jnp.float32,
    )

    loss = unproject_loss(batch_coords, gt_2d, M, intrinsic)
    loss = jax.block_until_ready(loss)

    ref = _reference(batch_coords, gt_2d, M, intrinsic)
    # sqrt/rsqrt fusion reorders ops slightly -> modest tolerance, still tight.
    assert jnp.allclose(loss, ref, rtol=1e-4, atol=1e-6), (loss, ref)

    print("KERNEL_OK")
</pallas_src>

<mosaic_0001>
module attributes {stable_mosaic.version = 11 : i64} {
  func.func @_unproject_loss_kernel(%arg0: i32, %arg1: memref<3x8x128xf32, #tpu.memory_space<vmem>>, %arg2: memref<2x8x128xf32, #tpu.memory_space<vmem>>, %arg3: memref<4x4xf32, #tpu.memory_space<smem>>, %arg4: memref<3x3xf32, #tpu.memory_space<smem>>, %arg5: memref<1x1x128xf32, #tpu.memory_space<vmem>>) attributes {dimension_semantics = [#tpu.dimension_semantics<parallel>], iteration_bounds = array<i64: 1>, scalar_prefetch = 0 : i64, scratch_operands = 0 : i64, tpu.core_type = #tpu.core_type<tc>, window_params = [{transform_indices = @transform_0, window_bounds = array<i64: 3, 8, 128>}, {transform_indices = @transform_1, window_bounds = array<i64: 2, 8, 128>}, {transform_indices = @transform_2, window_bounds = array<i64: 4, 4>}, {transform_indices = @transform_3, window_bounds = array<i64: 3, 3>}, {transform_indices = @transform_4, window_bounds = array<i64: 1, 1, 128>}]} {
    %c0 = arith.constant 0 : index
    %c0_0 = arith.constant 0 : index
    %c0_1 = arith.constant 0 : index
    %0 = vector.load %arg1[%c0, %c0_0, %c0_1] : memref<3x8x128xf32, #tpu.memory_space<vmem>>, vector<1x8x128xf32>
    %1 = vector.shape_cast %0 : vector<1x8x128xf32> to vector<8x128xf32>
    %c1 = arith.constant 1 : index
    %c0_2 = arith.constant 0 : index
    %c0_3 = arith.constant 0 : index
    %2 = vector.load %arg1[%c1, %c0_2, %c0_3] : memref<3x8x128xf32, #tpu.memory_space<vmem>>, vector<1x8x128xf32>
    %3 = vector.shape_cast %2 : vector<1x8x128xf32> to vector<8x128xf32>
    %c2 = arith.constant 2 : index
    %c0_4 = arith.constant 0 : index
    %c0_5 = arith.constant 0 : index
    %4 = vector.load %arg1[%c2, %c0_4, %c0_5] : memref<3x8x128xf32, #tpu.memory_space<vmem>>, vector<1x8x128xf32>
    %5 = vector.shape_cast %4 : vector<1x8x128xf32> to vector<8x128xf32>
    %c0_6 = arith.constant 0 : index
    %c0_7 = arith.constant 0 : index
    %6 = memref.load %arg3[%c0_6, %c0_7] : memref<4x4xf32, #tpu.memory_space<smem>>
    %7 = vector.broadcast %6 : f32 to vector<8x128xf32>
    %8 = arith.mulf %1, %7 : vector<8x128xf32>
    %c0_8 = arith.constant 0 : index
    %c1_9 = arith.constant 1 : index
    %9 = memref.load %arg3[%c0_8, %c1_9] : memref<4x4xf32, #tpu.memory_space<smem>>
    %10 = vector.broadcast %9 : f32 to vector<8x128xf32>
    %11 = arith.mulf %3, %10 : vector<8x128xf32>
    %12 = arith.addf %8, %11 : vector<8x128xf32>
    %c0_10 = arith.constant 0 : index
    %c2_11 = arith.constant 2 : index
    %13 = memref.load %arg3[%c0_10, %c2_11] : memref<4x4xf32, #tpu.memory_space<smem>>
    %14 = vector.broadcast %13 : f32 to vector<8x128xf32>
    %15 = arith.mulf %5, %14 : vector<8x128xf32>
    %16 = arith.addf %12, %15 : vector<8x128xf32>
    %c0_12 = arith.constant 0 : index
    %c3 = arith.constant 3 : index
    %17 = memref.load %arg3[%c0_12, %c3] : memref<4x4xf32, #tpu.memory_space<smem>>
    %18 = vector.broadcast %17 : f32 to vector<8x128xf32>
    %19 = arith.addf %16, %18 : vector<8x128xf32>
    %c1_13 = arith.constant 1 : index
    %c0_14 = arith.constant 0 : index
    %20 = memref.load %arg3[%c1_13, %c0_14] : memref<4x4xf32, #tpu.memory_space<smem>>
    %21 = vector.broadcast %20 : f32 to vector<8x128xf32>
    %22 = arith.mulf %1, %21 : vector<8x128xf32>
    %c1_15 = arith.constant 1 : index
    %c1_16 = arith.constant 1 : index
    %23 = memref.load %arg3[%c1_15, %c1_16] : memref<4x4xf32, #tpu.memory_space<smem>>
    %24 = vector.broadcast %23 : f32 to vector<8x128xf32>
    %25 = arith.mulf %3, %24 : vector<8x128xf32>
    %26 = arith.addf %22, %25 : vector<8x128xf32>
    %c1_17 = arith.constant 1 : index
    %c2_18 = arith.constant 2 : index
    %27 = memref.load %arg3[%c1_17, %c2_18] : memref<4x4xf32, #tpu.memory_space<smem>>
    %28 = vector.broadcast %27 : f32 to vector<8x128xf32>
    %29 = arith.mulf %5, %28 : vector<8x128xf32>
    %30 = arith.addf %26, %29 : vector<8x128xf32>
    %c1_19 = arith.constant 1 : index
    %c3_20 = arith.constant 3 : index
    %31 = memref.load %arg3[%c1_19, %c3_20] : memref<4x4xf32, #tpu.memory_space<smem>>
    %32 = vector.broadcast %31 : f32 to vector<8x128xf32>
    %33 = arith.addf %30, %32 : vector<8x128xf32>
    %c2_21 = arith.constant 2 : index
    %c0_22 = arith.constant 0 : index
    %34 = memref.load %arg3[%c2_21, %c0_22] : memref<4x4xf32, #tpu.memory_space<smem>>
    %35 = vector.broadcast %34 : f32 to vector<8x128xf32>
    %36 = arith.mulf %1, %35 : vector<8x128xf32>
    %c2_23 = arith.constant 2 : index
    %c1_24 = arith.constant 1 : index
    %37 = memref.load %arg3[%c2_23, %c1_24] : memref<4x4xf32, #tpu.memory_space<smem>>
    %38 = vector.broadcast %37 : f32 to vector<8x128xf32>
    %39 = arith.mulf %3, %38 : vector<8x128xf32>
    %40 = arith.addf %36, %39 : vector<8x128xf32>
    %c2_25 = arith.constant 2 : index
    %c2_26 = arith.constant 2 : index
    %41 = memref.load %arg3[%c2_25, %c2_26] : memref<4x4xf32, #tpu.memory_space<smem>>
    %42 = vector.broadcast %41 : f32 to vector<8x128xf32>
    %43 = arith.mulf %5, %42 : vector<8x128xf32>
    %44 = arith.addf %40, %43 : vector<8x128xf32>
    %c2_27 = arith.constant 2 : index
    %c3_28 = arith.constant 3 : index
    %45 = memref.load %arg3[%c2_27, %c3_28] : memref<4x4xf32, #tpu.memory_space<smem>>
    %46 = vector.broadcast %45 : f32 to vector<8x128xf32>
    %47 = arith.addf %44, %46 : vector<8x128xf32>
    %c0_29 = arith.constant 0 : index
    %c0_30 = arith.constant 0 : index
    %48 = memref.load %arg4[%c0_29, %c0_30] : memref<3x3xf32, #tpu.memory_space<smem>>
    %cst = arith.constant 1.000000e+00 : f32
    %49 = arith.divf %cst, %48 : f32
    %c1_31 = arith.constant 1 : index
    %c1_32 = arith.constant 1 : index
    %50 = memref.load %arg4[%c1_31, %c1_32] : memref<3x3xf32, #tpu.memory_space<smem>>
    %cst_33 = arith.constant 1.000000e+00 : f32
    %51 = arith.divf %cst_33, %50 : f32
    %c0_34 = arith.constant 0 : index
    %c2_35 = arith.constant 2 : index
    %52 = memref.load %arg4[%c0_34, %c2_35] : memref<3x3xf32, #tpu.memory_space<smem>>
    %c1_36 = arith.constant 1 : index
    %c2_37 = arith.constant 2 : index
    %53 = memref.load %arg4[%c1_36, %c2_37] : memref<3x3xf32, #tpu.memory_space<smem>>
    %c0_38 = arith.constant 0 : index
    %c0_39 = arith.constant 0 : index
    %c0_40 = arith.constant 0 : index
    %54 = vector.load %arg2[%c0_38, %c0_39, %c0_40] : memref<2x8x128xf32, #tpu.memory_space<vmem>>, vector<1x8x128xf32>
    %55 = vector.shape_cast %54 : vector<1x8x128xf32> to vector<8x128xf32>
    %56 = vector.broadcast %52 : f32 to vector<8x128xf32>
    %57 = arith.subf %55, %56 : vector<8x128xf32>
    %58 = vector.broadcast %49 : f32 to vector<8x128xf32>
    %59 = arith.mulf %57, %58 : vector<8x128xf32>
    %c1_41 = arith.constant 1 : index
    %c0_42 = arith.constant 0 : index
    %c0_43 = arith.constant 0 : index
    %60 = vector.load %arg2[%c1_41, %c0_42, %c0_43] : memref<2x8x128xf32, #tpu.memory_space<vmem>>, vector<1x8x128xf32>
    %61 = vector.shape_cast %60 : vector<1x8x128xf32> to vector<8x128xf32>
    %62 = vector.broadcast %53 : f32 to vector<8x128xf32>
    %63 = arith.subf %61, %62 : vector<8x128xf32>
    %64 = vector.broadcast %51 : f32 to vector<8x128xf32>
    %65 = arith.mulf %63, %64 : vector<8x128xf32>
    %66 = arith.mulf %59, %47 : vector<8x128xf32>
    %67 = arith.subf %66, %19 : vector<8x128xf32>
    %68 = arith.mulf %65, %47 : vector<8x128xf32>
    %69 = arith.subf %68, %33 : vector<8x128xf32>
    %70 = arith.mulf %67, %67 : vector<8x128xf32>
    %71 = arith.mulf %69, %69 : vector<8x128xf32>
    %72 = arith.addf %70, %71 : vector<8x128xf32>
    %73 = arith.mulf %59, %59 : vector<8x128xf32>
    %74 = arith.mulf %65, %65 : vector<8x128xf32>
    %75 = arith.addf %73, %74 : vector<8x128xf32>
    %cst_44 = arith.constant 1.000000e+00 : f32
    %76 = vector.broadcast %cst_44 : f32 to vector<8x128xf32>
    %77 = arith.addf %75, %76 : vector<8x128xf32>
    %78 = arith.mulf %19, %19 : vector<8x128xf32>
    %79 = arith.mulf %33, %33 : vector<8x128xf32>
    %80 = arith.addf %78, %79 : vector<8x128xf32>
    %81 = arith.mulf %47, %47 : vector<8x128xf32>
    %82 = arith.addf %80, %81 : vector<8x128xf32>
    %83 = arith.mulf %77, %82 : vector<8x128xf32>
    %84 = math.sqrt %72 : vector<8x128xf32>
    %85 = math.rsqrt %83 : vector<8x128xf32>
    %86 = arith.mulf %84, %85 : vector<8x128xf32>
    %c1024_i32 = arith.constant 1024 : i32
    %87 = arith.muli %arg0, %c1024_i32 : i32
    %88 = tpu.iota {dimensions = array<i32: 0>} : vector<8x128xi32>
    %89 = tpu.iota {dimensions = array<i32: 1>} : vector<8x128xi32>
    %c128_i32 = arith.constant 128 : i32
    %90 = vector.broadcast %c128_i32 : i32 to vector<8x128xi32>
    %91 = arith.muli %88, %90 : vector<8x128xi32>
    %92 = vector.broadcast %87 : i32 to vector<8x128xi32>
    %93 = arith.addi %92, %91 : vector<8x128xi32>
    %94 = arith.addi %93, %89 : vector<8x128xi32>
    %c16_i32 = arith.constant 16 : i32
    %95 = vector.broadcast %c16_i32 : i32 to vector<8x128xi32>
    %96 = arith.cmpi slt, %94, %95 : vector<8x128xi32>
    %cst_45 = arith.constant 0.000000e+00 : f32
    %97 = vector.broadcast %cst_45 : f32 to vector<8x128xf32>
    %98 = arith.select %96, %86, %97 : vector<8x128xi1>, vector<8x128xf32>
    %cst_46 = arith.constant dense<0.000000e+00> : vector<128xf32>
    %99 = vector.multi_reduction <add>, %98, %cst_46 [0] : vector<8x128xf32> to vector<128xf32>
    %100 = vector.shape_cast %99 : vector<128xf32> to vector<1x1x128xf32>
    %c0_47 = arith.constant 0 : index
    %c0_48 = arith.constant 0 : index
    %c0_49 = arith.constant 0 : index
    %101 = vector.load %arg5[%c0_47, %c0_48, %c0_49] : memref<1x1x128xf32, #tpu.memory_space<vmem>>, vector<1x1x128xf32>
    tpu.vector_store %arg5[%c0_47, %c0_48, %c0_49], %100 {strides = array<i32>} : memref<1x1x128xf32, #tpu.memory_space<vmem>>, vector<1x1x128xf32>,
    return
  }
  func.func @transform_0(%arg0: i32) -> (i32, i32, i32) {
    %c0_i32 = arith.constant 0 : i32
    %c0_i32_0 = arith.constant 0 : i32
    %c0_i32_1 = arith.constant 0 : i32
    return %c0_i32, %arg0, %c0_i32_0 : i32, i32, i32
  }
  func.func @transform_1(%arg0: i32) -> (i32, i32, i32) {
    %c0_i32 = arith.constant 0 : i32
    %c0_i32_0 = arith.constant 0 : i32
    %c0_i32_1 = arith.constant 0 : i32
    return %c0_i32, %arg0, %c0_i32_0 : i32, i32, i32
  }
  func.func @transform_2(%arg0: i32) -> (i32, i32) {
    %c0_i32 = arith.constant 0 : i32
    %c0_i32_0 = arith.constant 0 : i32
    %c0_i32_1 = arith.constant 0 : i32
    return %c0_i32, %c0_i32_0 : i32, i32
  }
  func.func @transform_3(%arg0: i32) -> (i32, i32) {
    %c0_i32 = arith.constant 0 : i32
    %c0_i32_0 = arith.constant 0 : i32
    %c0_i32_1 = arith.constant 0 : i32
    return %c0_i32, %c0_i32_0 : i32, i32
  }
  func.func @transform_4(%arg0: i32) -> (i32, i32, i32) {
    %c0_i32 = arith.constant 0 : i32
    %c0_i32_0 = arith.constant 0 : i32
    %c0_i32_1 = arith.constant 0 : i32
    return %arg0, %c0_i32, %c0_i32_0 : i32, i32, i32
  }
}

</mosaic_0001>

<llo_original>
// kernel: _unproject_loss_impl.1
$region0: #{_unproject_loss_impl.1}
  #allocation0 [shape = 'u32[]', space=smem, size = 0x4, offset = 0x4, fixed_abs, tag = 'smem constant byte address 0x4 - core index']
  #allocation1 [shape = 'u32[72,128]{1,0:T(1,128)}', space=vmem, size = 0x9000, scoped, tag = 'internal scratch']
  %s0 = inlined_call_operand.vmem [shape: f32[3,8,128], index: 0, kind: input, shape index: {}]
  %s1 = inlined_call_operand.vmem [shape: f32[2,8,128], index: 1, kind: input, shape index: {}]
  %s2 = inlined_call_operand.vmem [shape: f32[4,4], index: 2, kind: input, shape index: {}]
  %s3 = inlined_call_operand.vmem [shape: f32[3,3], index: 3, kind: input, shape index: {}]
  %s4 = inlined_call_operand.vmem [shape: f32[1,1,128], index: 4, kind: output, shape index: {}]
  %s5 = sld [smem:[#allocation0]]
  $region34: #{_unproject_loss_impl.1} parent=0
    _
  %s7 = ssub.s32 1, %s5
  %s8 = scalar_select 0, %s7, %s5
  $region1: #{_unproject_loss_impl.1} parent=0
    #allocation2 [shape = 'u8[2048]{0}', space=smem, size = 0x800, scoped, tag = 'input window, operand 2, single buffered']
    #allocation3 [shape = 's32[1]{0}', space=sflag, size = 0x4, scoped, tag = 'scoped memory for _unproject_loss_impl.1']
    #allocation4 [shape = 'u8[2048]{0}', space=smem, size = 0x800, scoped, tag = 'input window, operand 3, single buffered']
    #allocation5 [shape = 's32[1]{0}', space=sflag, size = 0x4, scoped, tag = 'scoped memory for _unproject_loss_impl.1']
    %9 = vsyncpa [#allocation3], 0
    %10 = vsyncpa [#allocation5], 0
    // Predicated region
    $region2: #{_unproject_loss_impl.1} parent=1 // pred_check
      _
    $region3: #{_unproject_loss_impl.1} parent=1 // pred_check_branch
      %12 = sbr.rel (0) target = $region5
    $region4: #{_unproject_loss_impl.1} parent=1 // pred_region
      _
    $region5: #{_unproject_loss_impl.1} parent=1 // pred_fallthru
      _
    // Predicated region
    $region6: #{_unproject_loss_impl.1} parent=1 // pred_check
      _
    $region7: #{_unproject_loss_impl.1} parent=1 // pred_check_branch
      %14 = sbr.rel (0) target = $region9
    $region8: #{_unproject_loss_impl.1} parent=1 // pred_region
      _
    $region9: #{_unproject_loss_impl.1} parent=1 // pred_fallthru
      _
    // Predicated region
    $region10: #{_unproject_loss_impl.1} parent=1 // pred_check
      _
    $region11: #{_unproject_loss_impl.1} parent=1 // pred_check_branch
      %16 = sbr.rel (0) target = $region13
    $region12: #{_unproject_loss_impl.1} parent=1 // pred_region
      %18 = vsyncadd [#allocation3], 0
      %s20 = sshll.u32 %s2, 4
      %s21 = int_to_ptr.vmem [resolvable:$true] %s20
      %23 = dma.vmem_to_smem %s21, 64, [#allocation2], [#allocation3]
    $region13: #{_unproject_loss_impl.1} parent=1 // pred_fallthru
      _
    // Predicated region
    $region14: #{_unproject_loss_impl.1} parent=1 // pred_check
      _
    $region15: #{_unproject_loss_impl.1} parent=1 // pred_check_branch
      %25 = sbr.rel (0) target = $region17
    $region16: #{_unproject_loss_impl.1} parent=1 // pred_region
      %27 = vsyncadd [#allocation5], 0
      %s29 = sshll.u32 %s3, 4
      %s30 = int_to_ptr.vmem [resolvable:$true] %s29
      %32 = dma.vmem_to_smem %s30, 64, [#allocation4], [#allocation5]
    $region17: #{_unproject_loss_impl.1} parent=1 // pred_fallthru
      _
    // Predicated region
    $region18: #{_unproject_loss_impl.1} parent=1 // pred_check
      _
    $region19: #{_unproject_loss_impl.1} parent=1 // pred_check_branch
      %34 = sbr.rel (0) target = $region21
    $region20: #{_unproject_loss_impl.1} parent=1 // pred_region
      %36 = dma.done [#allocation3], 64
    $region21: #{_unproject_loss_impl.1} parent=1 // pred_fallthru
      _
    // Predicated region
    $region22: #{_unproject_loss_impl.1} parent=1 // pred_check
      _
    $region23: #{_unproject_loss_impl.1} parent=1 // pred_check_branch
      %38 = sbr.rel (0) target = $region25
    $region24: #{_unproject_loss_impl.1} parent=1 // pred_region
      %40 = dma.done [#allocation5], 64
    $region25: #{_unproject_loss_impl.1} parent=1 // pred_fallthru
      _
    %41 = sfence
    %v42 = vld [vmem:[%s0] sm:$0xff]
    %s43 = scalar_lea.vmem %s0, 8
    %v44 = vld [vmem:[%s43] sm:$0xff]
    %s45 = scalar_lea.vmem %s0, 16
    %v46 = vld [vmem:[%s45] sm:$0xff]
    %s47 = sld [smem:[#allocation2]]
    %v48 = vstv %s47
    %v49 = vmul.f32 %v42, %v48
    %s50 = sld [smem:[#allocation2 + $0x1]]
    %v51 = vstv %s50
    %v52 = vmul.f32 %v44, %v51
    %v53 = vadd.f32 %v49, %v52
    %s54 = sld [smem:[#allocation2 + $0x2]]
    %v55 = vstv %s54
    %v56 = vmul.f32 %v46, %v55
    %v57 = vadd.f32 %v53, %v56
    %s58 = sld [smem:[#allocation2 + $0x3]]
    %v59 = vstv %s58
    %v60 = vadd.f32 %v57, %v59
    %s61 = sld [smem:[#allocation2 + $0x80]]
    %v62 = vstv %s61
    %v63 = vmul.f32 %v42, %v62
    %s64 = sld [smem:[#allocation2 + $0x81]]
    %v65 = vstv %s64
    %v66 = vmul.f32 %v44, %v65
    %v67 = vadd.f32 %v63, %v66
    %s68 = sld [smem:[#allocation2 + $0x82]]
    %v69 = vstv %s68
    %v70 = vmul.f32 %v46, %v69
    %v71 = vadd.f32 %v67, %v70
    %s72 = sld [smem:[#allocation2 + $0x83]]
    %v73 = vstv %s72
    %v74 = vadd.f32 %v71, %v73
    %s75 = sld [smem:[#allocation2 + $0x100]]
    %v76 = vstv %s75
    %v77 = vmul.f32 %v42, %v76
    %s78 = sld [smem:[#allocation2 + $0x101]]
    %v79 = vstv %s78
    %v80 = vmul.f32 %v44, %v79
    %v81 = vadd.f32 %v77, %v80
    %s82 = sld [smem:[#allocation2 + $0x102]]
    %v83 = vstv %s82
    %v84 = vmul.f32 %v46, %v83
    %v85 = vadd.f32 %v81, %v84
    %s86 = sld [smem:[#allocation2 + $0x103]]
    %v87 = vstv %s86
    %v88 = vadd.f32 %v85, %v87
    %s89 = sld [smem:[#allocation4]]
    %v90 = vstv %s89
    %v91 = vrcp.pop %v90
    %v92 = vmul.f32 %v90, %v91
    %v93 = vsub.f32 1.0, %v92
    %v94 = vmul.f32 %v91, %v93
    %v95 = vadd.f32 %v91, %v94
    %vm96 = vweird.f32 %v90
    %vm97 = vweird.f32 %v91
    %vm98 = vmor %vm96, %vm97
    %v99 = vsel %vm98, %v91, %v95
    %v100 = vand.u32 2147483647, %v90
    %vm101 = vcmp.eq.f32.partialorder %v100, 8.507059e+37
    %v102 = vand.u32 %v90, 2147483648
    %v103 = vor.u32 1.1754944e-38, %v102
    %v104 = vsel %vm101, %v103, %v99
    %s105 = vtos %v104
    %s106 = sld [smem:[#allocation4 + $0x81]]
    %v107 = vstv %s106
    %v108 = vrcp.pop %v107
    %v109 = vmul.f32 %v107, %v108
    %v110 = vsub.f32 1.0, %v109
    %v111 = vmul.f32 %v108, %v110
    %v112 = vadd.f32 %v108, %v111
    %vm113 = vweird.f32 %v107
    %vm114 = vweird.f32 %v108
    %vm115 = vmor %vm113, %vm114
    %v116 = vsel %vm115, %v108, %v112
    %v117 = vand.u32 2147483647, %v107
    %vm118 = vcmp.eq.f32.partialorder %v117, 8.507059e+37
    %v119 = vand.u32 %v107, 2147483648
    %v120 = vor.u32 1.1754944e-38, %v119
    %v121 = vsel %vm118, %v120, %v116
    %s122 = vtos %v121
    %s123 = sld [smem:[#allocation4 + $0x2]]
    %s124 = sld [smem:[#allocation4 + $0x82]]
    %v125 = vld [vmem:[%s1] sm:$0xff]
    %v126 = vstv %s123
    %v127 = vsub.f32 %v125, %v126
    %v128 = vstv %s105
    %v129 = vmul.f32 %v127, %v128
    %s130 = scalar_lea.vmem %s1, 8
    %v131 = vld [vmem:[%s130] sm:$0xff]
    %v132 = vstv %s124
    %v133 = vsub.f32 %v131, %v132
    %v134 = vstv %s122
    %v135 = vmul.f32 %v133, %v134
    %v136 = vmul.f32 %v129, %v88
    %v137 = vsub.f32 %v136, %v60
    %v138 = vmul.f32 %v135, %v88
    %v139 = vsub.f32 %v138, %v74
    %v140 = vmul.f32 %v137, %v137
    %v141 = vmul.f32 %v139, %v139
    %v142 = vadd.f32 %v140, %v141
    %v143 = vmul.f32 %v129, %v129
    %v144 = vmul.f32 %v135, %v135
    %v145 = vadd.f32 %v143, %v144
    %v146 = vadd.f32 %v145, 1.0
    %v147 = vmul.f32 %v60, %v60
    %v148 = vmul.f32 %v74, %v74
    %v149 = vadd.f32 %v147, %v148
    %v150 = vmul.f32 %v88, %v88
    %v151 = vadd.f32 %v149, %v150
    %v152 = vmul.f32 %v146, %v151
    %v153 = vrsqrt.pop %v142
    %v154 = vmul.f32 %v153, %v142
    %v155 = vmul.f32 %v154, %v153
    %v156 = vmul.f32 0.5, %v155
    %v157 = vsub.f32 1.5, %v156
    %v158 = vmul.f32 %v153, %v157
    %v159 = vmul.f32 %v142, %v158
    %vm160 = vcmp.eq.f32.partialorder %v142, inf
    %v161 = vsel %vm160, %v142, %v159
    %vm162 = vcmp.eq.f32.partialorder %v142, 0.0
    %v163 = vand.u32 %v142, 2147483648
    %v164 = vsel %vm162, %v163, %v161
    %v165 = vrsqrt.pop %v152
    %v166 = vmul.f32 %v165, %v152
    %v167 = vmul.f32 %v166, %v165
    %v168 = vmul.f32 0.5, %v167
    %v169 = vsub.f32 1.5, %v168
    %v170 = vmul.f32 %v165, %v169
    %vm171 = vweird.f32 %v152
    %vm172 = vweird.f32 %v165
    %vm173 = vmor %vm171, %vm172
    %v174 = vsel %vm173, %v165, %v170
    %v175 = vmul.f32 %v164, %v174
    %s176 = smul.u32 0, 1024
    %v177 = vlaneseq
    %v178 = vshrl.u32 %v177, 7
    %v179 = vlaneseq
    %v180 = vand.u32 %v179, 127
    %v181 = vmul.u32 %v178, 128
    %v182 = vstv %s176
    %v183 = vadd.s32 %v182, %v181
    %v184 = vadd.s32 %v183, %v180
    %vm185 = vcmp.lt.s32.totalorder %v184, 16
    %v186 = vsel %vm185, %v175, 0.0
    %v187 = vrot.slane %v186, 4
    %v188 = vadd.f32 %v186, %v187
    %v189 = vrot.slane %v188, 2
    %v190 = vadd.f32 %v188, %v189
    %v191 = vrot.slane %v190, 1
    %v192 = vadd.f32 %v190, %v191
    %193 = vst [vmem:[%s4] sm:$0x1] %v192
    // Predicated region
    $region26: #{_unproject_loss_impl.1} parent=1 // pred_check
      _
    $region27: #{_unproject_loss_impl.1} parent=1 // pred_check_branch
      %195 = sbr.rel (0) target = $region29
    $region28: #{_unproject_loss_impl.1} parent=1 // pred_region
      _
    $region29: #{_unproject_loss_impl.1} parent=1 // pred_fallthru
      _
    // Predicated region
    $region30: #{_unproject_loss_impl.1} parent=1 // pred_check
      _
    $region31: #{_unproject_loss_impl.1} parent=1 // pred_check_branch
      %197 = sbr.rel (0) target = $region33
    $region32: #{_unproject_loss_impl.1} parent=1 // pred_region
      _
    $region33: #{_unproject_loss_impl.1} parent=1 // pred_fallthru
      _
    %198 = vsyncpa [#allocation3], 1
    %199 = vsyncpa [#allocation5], 1

</llo_original>
